<compile_context>
chip_gen: v6e
topology: v6e:2x2x1
jax: 0.10.0
libtpu: 0.0.40
codegen_flags: <defaults>
</compile_context>

<pallas_src>
import jax
import jax.numpy as jnp
from jax import lax
from jax.experimental import pallas as pl
from jax.experimental.pallas import tpu as pltpu


def _make_tv_l1_kernel(B, NC, bpp):
    """Kernel closure over static tiling constants."""

    def kernel(x_ref, y_ref, out_ref):
        # x_ref, y_ref: (B, H, W) tile of B consecutive (n, c) slices.
        # out_ref:      (1, 1, W) per-lane f32 accumulator for this core/partition.
        p = pl.program_id(0)   # parallel partition (TensorCore) index
        j = pl.program_id(1)   # sequential block index within the partition

        @pl.when(j == 0)
        def _():
            out_ref[...] = jnp.zeros_like(out_ref)

        # z = x - y once; vertical TV of z equals h_tv_x - h_tv_y.
        z = x_ref[...].astype(jnp.float32) - y_ref[...].astype(jnp.float32)
        d = jnp.abs(z[:, 1:, :] - z[:, :-1, :])          # (B, H-1, W)

        # Mask slices that fall past the end of the (N*C) axis (tail blocks /
        # uneven split across partitions read undefined data -> force to 0).
        slice_start = (p * bpp + j) * B
        rem = NC - slice_start
        valid = lax.broadcasted_iota(jnp.int32, (B, 1, 1), 0) < rem
        d = jnp.where(valid, d, 0.0)

        # Per-lane partial sums: VPU adds over B, sublane reduce over H-1;
        # the cross-lane reduce is deferred to the wrapper (done once).
        out_ref[...] += jnp.sum(d, axis=(0, 1), keepdims=True)

    return kernel


def drecloss_stripe(x, y, weight=1.0, *, target_tile_bytes=4 * 1024 * 1024):
    """JAX/Pallas equivalent of Drecloss_stripe.forward (NCHW inputs)."""
    N, C, H, W = x.shape
    assert y.shape == x.shape, "x and y must have identical shapes"
    if H < 2:
        # No vertical differences exist; define the loss as 0 (PyTorch would
        # produce a NaN mean over an empty tensor).
        return jnp.float32(0.0)

    NC = N * C
    xf = x.reshape(NC, H, W)
    yf = y.reshape(NC, H, W)

    # Pick B so each input tile is ~target_tile_bytes (capped at NC slices).
    slice_bytes = H * W * x.dtype.itemsize
    B = int(max(1, min(NC, target_tile_bytes // max(1, slice_bytes))))
    NCb = -(-NC // B)                 # number of B-slice blocks
    P = 2 if NCb >= 2 else 1          # use 2 partitions when there is enough work
    bpp = -(-NCb // P)                # blocks per partition (tail masked in-kernel)

    kernel = _make_tv_l1_kernel(B, NC, bpp)

    partials = pl.pallas_call(
        kernel,
        out_shape=jax.ShapeDtypeStruct((P, 1, W), jnp.float32),
        grid=(P, bpp),
        in_specs=[
            pl.BlockSpec((B, H, W), lambda p, j: (p * bpp + j, 0, 0)),
            pl.BlockSpec((B, H, W), lambda p, j: (p * bpp + j, 0, 0)),
        ],
        out_specs=pl.BlockSpec((1, 1, W), lambda p, j: (p, 0, 0)),
        compiler_params=pltpu.CompilerParams(
            dimension_semantics=("parallel", "arbitrary"),
            vmem_limit_bytes=64 * 1024 * 1024,
        ),
    )(xf, yf)

    # L1Loss default reduction='mean' over all elements of the TV tensors.
    count = NC * (H - 1) * W
    total = jnp.sum(partials)         # single final cross-lane/partition reduce
    return (weight * total / count).astype(jnp.float32)


def _reference(x, y, weight=1.0):
    h_tv_x = x[:, :, 1:, :] - x[:, :, :-1, :]
    h_tv_y = y[:, :, 1:, :] - y[:, :, :-1, :]
    return weight * jnp.mean(jnp.abs(h_tv_x - h_tv_y))


if __name__ == "__main__":
    key = jax.random.PRNGKey(0)
    kx, ky = jax.random.split(key)

    # Primary test: NCHW shapes consistent with the module.
    x = jax.random.normal(kx, (2, 4, 16, 16), dtype=jnp.float32)
    y = jax.random.normal(ky, (2, 4, 16, 16), dtype=jnp.float32)

    loss = drecloss_stripe(x, y, weight=1.0)
    jax.block_until_ready(loss)
    ref = _reference(x, y, weight=1.0)
    assert jnp.allclose(loss, ref, rtol=1e-5, atol=1e-6), (loss, ref)

    # Secondary test: N*C not divisible by B and multiple blocks per partition
    # (exercises the parallel split + tail masking paths).
    k2x, k2y = jax.random.split(jax.random.PRNGKey(1))
    x2 = jax.random.normal(k2x, (3, 5, 16, 16), dtype=jnp.float32)
    y2 = jax.random.normal(k2y, (3, 5, 16, 16), dtype=jnp.float32)
    loss2 = drecloss_stripe(x2, y2, weight=1.0,
                            target_tile_bytes=2 * 16 * 16 * 4)  # force B=2
    jax.block_until_ready(loss2)
    ref2 = _reference(x2, y2, weight=1.0)
    assert jnp.allclose(loss2, ref2, rtol=1e-5, atol=1e-6), (loss2, ref2)

    print("KERNEL_OK")
</pallas_src>

<mosaic_0001>
module attributes {stable_mosaic.version = 11 : i64} {
  func.func @kernel(%arg0: i32, %arg1: i32, %arg2: memref<8x16x16xf32, #tpu.memory_space<vmem>>, %arg3: memref<8x16x16xf32, #tpu.memory_space<vmem>>, %arg4: memref<1x1x16xf32, #tpu.memory_space<vmem>>) attributes {dimension_semantics = [#tpu.dimension_semantics<parallel>, #tpu.dimension_semantics<arbitrary>], iteration_bounds = array<i64: 1, 1>, scalar_prefetch = 0 : i64, scratch_operands = 0 : i64, tpu.core_type = #tpu.core_type<tc>, window_params = [{transform_indices = @transform_0, window_bounds = array<i64: 8, 16, 16>}, {transform_indices = @transform_1, window_bounds = array<i64: 8, 16, 16>}, {transform_indices = @transform_2, window_bounds = array<i64: 1, 1, 16>}]} {
    %c0_i32 = arith.constant 0 : i32
    %0 = arith.cmpi eq, %arg1, %c0_i32 : i32
    %1 = arith.extui %0 : i1 to i32
    %c0_i32_0 = arith.constant 0 : i32
    %2 = arith.cmpi ne, %1, %c0_i32_0 : i32
    scf.if %2 {
      %cst_14 = arith.constant 0.000000e+00 : f32
      %26 = vector.broadcast %cst_14 : f32 to vector<1x1x16xf32>
      %c0_15 = arith.constant 0 : index
      %c0_16 = arith.constant 0 : index
      %c0_17 = arith.constant 0 : index
      %27 = vector.load %arg4[%c0_15, %c0_16, %c0_17] : memref<1x1x16xf32, #tpu.memory_space<vmem>>, vector<1x1x16xf32>
      tpu.vector_store %arg4[%c0_15, %c0_16, %c0_17], %26 {strides = array<i32>} : memref<1x1x16xf32, #tpu.memory_space<vmem>>, vector<1x1x16xf32>,
    } else {
    }
    %c0 = arith.constant 0 : index
    %c0_1 = arith.constant 0 : index
    %c0_2 = arith.constant 0 : index
    %3 = vector.load %arg2[%c0, %c0_1, %c0_2] : memref<8x16x16xf32, #tpu.memory_space<vmem>>, vector<8x16x16xf32>
    %c0_3 = arith.constant 0 : index
    %c0_4 = arith.constant 0 : index
    %c0_5 = arith.constant 0 : index
    %4 = vector.load %arg3[%c0_3, %c0_4, %c0_5] : memref<8x16x16xf32, #tpu.memory_space<vmem>>, vector<8x16x16xf32>
    %5 = arith.subf %3, %4 : vector<8x16x16xf32>
    %6 = vector.extract_strided_slice %5 {offsets = [0, 1, 0], sizes = [8, 15, 16], strides = [1, 1, 1]} : vector<8x16x16xf32> to vector<8x15x16xf32>
    %7 = vector.extract_strided_slice %5 {offsets = [0, 0, 0], sizes = [8, 15, 16], strides = [1, 1, 1]} : vector<8x16x16xf32> to vector<8x15x16xf32>
    %8 = arith.subf %6, %7 : vector<8x15x16xf32>
    %9 = math.absf %8 : vector<8x15x16xf32>
    %c1_i32 = arith.constant 1 : i32
    %10 = arith.muli %arg0, %c1_i32 : i32
    %11 = arith.addi %10, %arg1 : i32
    %c8_i32 = arith.constant 8 : i32
    %12 = arith.muli %11, %c8_i32 : i32
    %c8_i32_6 = arith.constant 8 : i32
    %13 = arith.subi %c8_i32_6, %12 : i32
    %14 = tpu.iota {dimensions = array<i32: 0>} : vector<8x1x1xi32>
    %15 = vector.broadcast %13 : i32 to vector<8x1x1xi32>
    %16 = arith.cmpi slt, %14, %15 : vector<8x1x1xi32>
    %cst = arith.constant 0.000000e+00 : f32
    %17 = vector.shape_cast %16 : vector<8x1x1xi1> to vector<8x1x1xi1>
    %18 = vector.broadcast %17 : vector<8x1x1xi1> to vector<8x15x16xi1>
    %19 = vector.broadcast %cst : f32 to vector<8x15x16xf32>
    %20 = arith.select %18, %9, %19 : vector<8x15x16xi1>, vector<8x15x16xf32>
    %c0_7 = arith.constant 0 : index
    %c0_8 = arith.constant 0 : index
    %c0_9 = arith.constant 0 : index
    %21 = vector.load %arg4[%c0_7, %c0_8, %c0_9] : memref<1x1x16xf32, #tpu.memory_space<vmem>>, vector<1x1x16xf32>
    %cst_10 = arith.constant dense<0.000000e+00> : vector<16xf32>
    %22 = vector.multi_reduction <add>, %20, %cst_10 [0, 1] : vector<8x15x16xf32> to vector<16xf32>
    %23 = vector.shape_cast %22 : vector<16xf32> to vector<1x1x16xf32>
    %24 = arith.addf %21, %23 : vector<1x1x16xf32>
    %c0_11 = arith.constant 0 : index
    %c0_12 = arith.constant 0 : index
    %c0_13 = arith.constant 0 : index
    %25 = vector.load %arg4[%c0_11, %c0_12, %c0_13] : memref<1x1x16xf32, #tpu.memory_space<vmem>>, vector<1x1x16xf32>
    tpu.vector_store %arg4[%c0_11, %c0_12, %c0_13], %24 {strides = array<i32>} : memref<1x1x16xf32, #tpu.memory_space<vmem>>, vector<1x1x16xf32>,
    return
  }
  func.func @transform_0(%arg0: i32, %arg1: i32) -> (i32, i32, i32) {
    %c1_i32 = arith.constant 1 : i32
    %0 = arith.muli %arg0, %c1_i32 : i32
    %1 = arith.addi %0, %arg1 : i32
    %c0_i32 = arith.constant 0 : i32
    %c0_i32_0 = arith.constant 0 : i32
    %c0_i32_1 = arith.constant 0 : i32
    return %1, %c0_i32, %c0_i32_0 : i32, i32, i32
  }
  func.func @transform_1(%arg0: i32, %arg1: i32) -> (i32, i32, i32) {
    %c1_i32 = arith.constant 1 : i32
    %0 = arith.muli %arg0, %c1_i32 : i32
    %1 = arith.addi %0, %arg1 : i32
    %c0_i32 = arith.constant 0 : i32
    %c0_i32_0 = arith.constant 0 : i32
    %c0_i32_1 = arith.constant 0 : i32
    return %1, %c0_i32, %c0_i32_0 : i32, i32, i32
  }
  func.func @transform_2(%arg0: i32, %arg1: i32) -> (i32, i32, i32) {
    %c0_i32 = arith.constant 0 : i32
    %c0_i32_0 = arith.constant 0 : i32
    %c0_i32_1 = arith.constant 0 : i32
    return %arg0, %c0_i32, %c0_i32_0 : i32, i32, i32
  }
}

</mosaic_0001>

<llo_original>
// kernel: tpu_custom_call.1
$region0: #{tpu_custom_call.1}
  #allocation0 [shape = 'u32[]', space=smem, size = 0x4, offset = 0x4, fixed_abs, tag = 'smem constant byte address 0x4 - core index']
  #allocation1 [shape = 'u32[144,128]{1,0:T(1,128)}', space=vmem, size = 0x12000, scoped, tag = 'internal scratch']
  %s0 = inlined_call_operand.hbm [shape: f32[8,16,16], index: 0, kind: input, shape index: {}]
  %s1 = inlined_call_operand.hbm [shape: f32[8,16,16], index: 1, kind: input, shape index: {}]
  %s2 = inlined_call_operand.hbm [shape: f32[1,1,16], index: 2, kind: output, shape index: {}]
  %s3 = sld [smem:[#allocation0]]
  $region30: #{tpu_custom_call.1} parent=0
    _
  %s5 = ssub.s32 1, %s3
  %s6 = scalar_select 0, %s5, %s3
  $region1: #{tpu_custom_call.1} parent=0
    #allocation2 [shape = 'u8[65536]{0}', space=vmem, size = 0x10000, scoped, tag = 'input window, operand 0, single buffered']
    #allocation3 [shape = 's32[1]{0}', space=sflag, size = 0x4, scoped, tag = 'scoped memory for tpu_custom_call.1']
    #allocation4 [shape = 's32[1]{0}', space=sflag, size = 0x4, scoped, tag = 'scoped memory for tpu_custom_call.1']
    #allocation5 [shape = 'u8[65536]{0}', space=vmem, size = 0x10000, scoped, tag = 'input window, operand 1, single buffered']
    #allocation6 [shape = 's32[1]{0}', space=sflag, size = 0x4, scoped, tag = 'scoped memory for tpu_custom_call.1']
    #allocation7 [shape = 'u8[512]{0}', space=vmem, size = 0x400, scoped, tag = 'output window, operand 0, single buffered']
    %7 = vsyncpa [#allocation3], 0
    %8 = vsyncpa [#allocation6], 0
    %9 = vsyncpa [#allocation4], 0
    // Predicated region
    $region2: #{tpu_custom_call.1} parent=1 // pred_check
      _
    $region3: #{tpu_custom_call.1} parent=1 // pred_check_branch
      %11 = sbr.rel (0) target = $region5
    $region4: #{tpu_custom_call.1} parent=1 // pred_region
      %s12 = sadd.s32 0, 0
      %s13 = smul.u32 8, %s12
      %s15 = ssub.s32 2048, 2048
      %16 = vsyncadd [#allocation3], %s15
      %s17 = smul.addr %s13, 2
      %s18 = smul.addr %s17, 128
      %s19 = scalar_lea.hbm %s0, %s18
      %s20 = sshll.u32 [#allocation2], 4
      %s21 = int_to_ptr.vmem [resolvable:$true] %s20
      %26 = dma.hbm_to_vmem [thread:$0]  %s19, 2048, %s21, [#allocation3], 128, 128, 8
    $region5: #{tpu_custom_call.1} parent=1 // pred_fallthru
      _
    // Predicated region
    $region6: #{tpu_custom_call.1} parent=1 // pred_check
      _
    $region7: #{tpu_custom_call.1} parent=1 // pred_check_branch
      %28 = sbr.rel (0) target = $region9
    $region8: #{tpu_custom_call.1} parent=1 // pred_region
      %s29 = sadd.s32 0, 0
      %s30 = smul.u32 8, %s29
      %s32 = ssub.s32 2048, 2048
      %33 = vsyncadd [#allocation6], %s32
      %s34 = smul.addr %s30, 2
      %s35 = smul.addr %s34, 128
      %s36 = scalar_lea.hbm %s1, %s35
      %s37 = sshll.u32 [#allocation5], 4
      %s38 = int_to_ptr.vmem [resolvable:$true] %s37
      %43 = dma.hbm_to_vmem [thread:$0]  %s36, 2048, %s38, [#allocation6], 128, 128, 8
    $region9: #{tpu_custom_call.1} parent=1 // pred_fallthru
      _
    // Predicated region
    $region10: #{tpu_custom_call.1} parent=1 // pred_check
      _
    $region11: #{tpu_custom_call.1} parent=1 // pred_check_branch
      %45 = sbr.rel (0) target = $region13
    $region12: #{tpu_custom_call.1} parent=1 // pred_region
      %46 = dma.done [#allocation3], 2048
    $region13: #{tpu_custom_call.1} parent=1 // pred_fallthru
      _
    // Predicated region
    $region14: #{tpu_custom_call.1} parent=1 // pred_check
      _
    $region15: #{tpu_custom_call.1} parent=1 // pred_check_branch
      %48 = sbr.rel (0) target = $region17
    $region16: #{tpu_custom_call.1} parent=1 // pred_region
      %49 = dma.done [#allocation6], 2048
    $region17: #{tpu_custom_call.1} parent=1 // pred_fallthru
      _
    %s50 = sadd.s32 0, 0
    %s51 = smul.u32 8, %s50
    %s52 = sadd.s32 0, 0
    %s53 = smul.u32 8, %s52
    %p54 = scmp.eq.s32.totalorder 0, 0
    // Predicated region
    $region18: #{tpu_custom_call.1} parent=1 // pred_check
      %p55 = pneg %p54
    $region19: #{tpu_custom_call.1} parent=1 // pred_check_branch
      %57 = sbr.rel (%p55) target = $region21
    $region20: #{tpu_custom_call.1} parent=1 // pred_region
      %vm58 = vcmask 122880
      %59 = vst.msk [vmem:[#allocation7] sm:$0x1] %vm58, 0.0
    $region21: #{tpu_custom_call.1} parent=1 // pred_fallthru
      _
    %v60 = vld [vmem:[#allocation2] sm:$0xff]
    %v61 = vld [vmem:[#allocation2 + $0x8] sm:$0xff]
    %v62 = vld [vmem:[#allocation2 + $0x10] sm:$0xff]
    %v63 = vld [vmem:[#allocation2 + $0x18] sm:$0xff]
    %v64 = vld [vmem:[#allocation2 + $0x20] sm:$0xff]
    %v65 = vld [vmem:[#allocation2 + $0x28] sm:$0xff]
    %v66 = vld [vmem:[#allocation2 + $0x30] sm:$0xff]
    %v67 = vld [vmem:[#allocation2 + $0x38] sm:$0xff]
    %v68 = vld [vmem:[#allocation2 + $0x40] sm:$0xff]
    %v69 = vld [vmem:[#allocation2 + $0x48] sm:$0xff]
    %v70 = vld [vmem:[#allocation2 + $0x50] sm:$0xff]
    %v71 = vld [vmem:[#allocation2 + $0x58] sm:$0xff]
    %v72 = vld [vmem:[#allocation2 + $0x60] sm:$0xff]
    %v73 = vld [vmem:[#allocation2 + $0x68] sm:$0xff]
    %v74 = vld [vmem:[#allocation2 + $0x70] sm:$0xff]
    %v75 = vld [vmem:[#allocation2 + $0x78] sm:$0xff]
    %v76 = vld [vmem:[#allocation5] sm:$0xff]
    %v77 = vld [vmem:[#allocation5 + $0x8] sm:$0xff]
    %v78 = vld [vmem:[#allocation5 + $0x10] sm:$0xff]
    %v79 = vld [vmem:[#allocation5 + $0x18] sm:$0xff]
    %v80 = vld [vmem:[#allocation5 + $0x20] sm:$0xff]
    %v81 = vld [vmem:[#allocation5 + $0x28] sm:$0xff]
    %v82 = vld [vmem:[#allocation5 + $0x30] sm:$0xff]
    %v83 = vld [vmem:[#allocation5 + $0x38] sm:$0xff]
    %v84 = vld [vmem:[#allocation5 + $0x40] sm:$0xff]
    %v85 = vld [vmem:[#allocation5 + $0x48] sm:$0xff]
    %v86 = vld [vmem:[#allocation5 + $0x50] sm:$0xff]
    %v87 = vld [vmem:[#allocation5 + $0x58] sm:$0xff]
    %v88 = vld [vmem:[#allocation5 + $0x60] sm:$0xff]
    %v89 = vld [vmem:[#allocation5 + $0x68] sm:$0xff]
    %v90 = vld [vmem:[#allocation5 + $0x70] sm:$0xff]
    %v91 = vld [vmem:[#allocation5 + $0x78] sm:$0xff]
    %v92 = vsub.f32 %v60, %v76
    %v93 = vsub.f32 %v61, %v77
    %v94 = vsub.f32 %v62, %v78
    %v95 = vsub.f32 %v63, %v79
    %v96 = vsub.f32 %v64, %v80
    %v97 = vsub.f32 %v65, %v81
    %v98 = vsub.f32 %v66, %v82
    %v99 = vsub.f32 %v67, %v83
    %v100 = vsub.f32 %v68, %v84
    %v101 = vsub.f32 %v69, %v85
    %v102 = vsub.f32 %v70, %v86
    %v103 = vsub.f32 %v71, %v87
    %v104 = vsub.f32 %v72, %v88
    %v105 = vsub.f32 %v73, %v89
    %v106 = vsub.f32 %v74, %v90
    %v107 = vsub.f32 %v75, %v91
    %vm124 = vcmask 1040384
    %v125 = vrot.slane %v92, 7
    %v126 = vrot.slane %v93, 7
    %v127 = vsel %vm124, %v125, %v126
    %v128 = vrot.slane %v94, 7
    %v129 = vrot.slane %v95, 7
    %v130 = vsel %vm124, %v128, %v129
    %v131 = vrot.slane %v96, 7
    %v132 = vrot.slane %v97, 7
    %v133 = vsel %vm124, %v131, %v132
    %v134 = vrot.slane %v98, 7
    %v135 = vrot.slane %v99, 7
    %v136 = vsel %vm124, %v134, %v135
    %v137 = vrot.slane %v100, 7
    %v138 = vrot.slane %v101, 7
    %v139 = vsel %vm124, %v137, %v138
    %v140 = vrot.slane %v102, 7
    %v141 = vrot.slane %v103, 7
    %v142 = vsel %vm124, %v140, %v141
    %v143 = vrot.slane %v104, 7
    %v144 = vrot.slane %v105, 7
    %v145 = vsel %vm124, %v143, %v144
    %v146 = vrot.slane %v106, 7
    %v147 = vrot.slane %v107, 7
    %v148 = vsel %vm124, %v146, %v147
    %v165 = vsub.f32 %v92, %v125
    %v166 = vsub.f32 %v93, %v127
    %v167 = vsub.f32 %v94, %v128
    %v168 = vsub.f32 %v95, %v130
    %v169 = vsub.f32 %v96, %v131
    %v170 = vsub.f32 %v97, %v133
    %v171 = vsub.f32 %v98, %v134
    %v172 = vsub.f32 %v99, %v136
    %v173 = vsub.f32 %v100, %v137
    %v174 = vsub.f32 %v101, %v139
    %v175 = vsub.f32 %v102, %v140
    %v176 = vsub.f32 %v103, %v142
    %v177 = vsub.f32 %v104, %v143
    %v178 = vsub.f32 %v105, %v145
    %v179 = vsub.f32 %v106, %v146
    %v180 = vsub.f32 %v107, %v148
    %v181 = vand.u32 2147483647, %v165
    %v182 = vand.u32 2147483647, %v166
    %v183 = vand.u32 2147483647, %v167
    %v184 = vand.u32 2147483647, %v168
    %v185 = vand.u32 2147483647, %v169
    %v186 = vand.u32 2147483647, %v170
    %v187 = vand.u32 2147483647, %v171
    %v188 = vand.u32 2147483647, %v172
    %v189 = vand.u32 2147483647, %v173
    %v190 = vand.u32 2147483647, %v174
    %v191 = vand.u32 2147483647, %v175
    %v192 = vand.u32 2147483647, %v176
    %v193 = vand.u32 2147483647, %v177
    %v194 = vand.u32 2147483647, %v178
    %v195 = vand.u32 2147483647, %v179
    %v196 = vand.u32 2147483647, %v180
    %s197 = sadd.s32 0, 0
    %s198 = smul.u32 %s197, 8
    %s199 = ssub.s32 8, %s198
    %v200 = vstv %s199
    %vm201 = vcmp.gt.s32.totalorder %v200, 0
    %vm202 = vcmp.gt.s32.totalorder %v200, 1
    %vm203 = vcmp.gt.s32.totalorder %v200, 2
    %vm204 = vcmp.gt.s32.totalorder %v200, 3
    %vm205 = vcmp.gt.s32.totalorder %v200, 4
    %vm206 = vcmp.gt.s32.totalorder %v200, 5
    %vm207 = vcmp.gt.s32.totalorder %v200, 6
    %vm208 = vcmp.gt.s32.totalorder %v200, 7
    %v209 = vsel %vm201, 1, 0
    %v210 = vsel %vm202, 1, 0
    %v211 = vsel %vm203, 1, 0
    %v212 = vsel %vm204, 1, 0
    %v213 = vsel %vm205, 1, 0
    %v214 = vsel %vm206, 1, 0
    %v215 = vsel %vm207, 1, 0
    %v216 = vsel %vm208, 1, 0
    %vm217 = vcmp.eq.s32.totalorder %v209, 1
    %vm218 = vcmp.eq.s32.totalorder %v210, 1
    %vm219 = vcmp.eq.s32.totalorder %v211, 1
    %vm220 = vcmp.eq.s32.totalorder %v212, 1
    %vm221 = vcmp.eq.s32.totalorder %v213, 1
    %vm222 = vcmp.eq.s32.totalorder %v214, 1
    %vm223 = vcmp.eq.s32.totalorder %v215, 1
    %vm224 = vcmp.eq.s32.totalorder %v216, 1
    %v225 = vsel %vm217, %v181, 0.0
    %v226 = vsel %vm217, %v182, 0.0
    %v227 = vsel %vm218, %v183, 0.0
    %v228 = vsel %vm218, %v184, 0.0
    %v229 = vsel %vm219, %v185, 0.0
    %v230 = vsel %vm219, %v186, 0.0
    %v231 = vsel %vm220, %v187, 0.0
    %v232 = vsel %vm220, %v188, 0.0
    %v233 = vsel %vm221, %v189, 0.0
    %v234 = vsel %vm221, %v190, 0.0
    %v235 = vsel %vm222, %v191, 0.0
    %v236 = vsel %vm222, %v192, 0.0
    %v237 = vsel %vm223, %v193, 0.0
    %v238 = vsel %vm223, %v194, 0.0
    %v239 = vsel %vm224, %v195, 0.0
    %v240 = vsel %vm224, %v196, 0.0
    %v241 = vld [vmem:[#allocation7] sm:$0x1]
    %vm258 = vcmask 1046528
    %v259 = vrot.slane %v225, 1
    %v260 = vrot.slane %v226, 1
    %v261 = vsel %vm258, %v259, %v260
    %v262 = vrot.slane %v227, 1
    %v263 = vrot.slane %v228, 1
    %v264 = vsel %vm258, %v262, %v263
    %v265 = vrot.slane %v229, 1
    %v266 = vrot.slane %v230, 1
    %v267 = vsel %vm258, %v265, %v266
    %v268 = vrot.slane %v231, 1
    %v269 = vrot.slane %v232, 1
    %v270 = vsel %vm258, %v268, %v269
    %v271 = vrot.slane %v233, 1
    %v272 = vrot.slane %v234, 1
    %v273 = vsel %vm258, %v271, %v272
    %v274 = vrot.slane %v235, 1
    %v275 = vrot.slane %v236, 1
    %v276 = vsel %vm258, %v274, %v275
    %v277 = vrot.slane %v237, 1
    %v278 = vrot.slane %v238, 1
    %v279 = vsel %vm258, %v277, %v278
    %v280 = vrot.slane %v239, 1
    %v281 = vrot.slane %v240, 1
    %v282 = vsel %vm258, %v280, %v281
    %vm299 = vcmask 130048
    %v300 = vsel %vm299, %v261, 0.0
    %vm301 = vcmask 129024
    %v302 = vsel %vm301, %v260, 0.0
    %v303 = vadd.f32 %v300, %v302
    %v304 = vsel %vm299, %v264, 0.0
    %v305 = vadd.f32 %v303, %v304
    %v306 = vsel %vm301, %v263, 0.0
    %v307 = vadd.f32 %v305, %v306
    %v308 = vsel %vm299, %v267, 0.0
    %v309 = vadd.f32 %v307, %v308
    %v310 = vsel %vm301, %v266, 0.0
    %v311 = vadd.f32 %v309, %v310
    %v312 = vsel %vm299, %v270, 0.0
    %v313 = vadd.f32 %v311, %v312
    %v314 = vsel %vm301, %v269, 0.0
    %v315 = vadd.f32 %v313, %v314
    %v316 = vsel %vm299, %v273, 0.0
    %v317 = vadd.f32 %v315, %v316
    %v318 = vsel %vm301, %v272, 0.0
    %v319 = vadd.f32 %v317, %v318
    %v320 = vsel %vm299, %v276, 0.0
    %v321 = vadd.f32 %v319, %v320
    %v322 = vsel %vm301, %v275, 0.0
    %v323 = vadd.f32 %v321, %v322
    %v324 = vsel %vm299, %v279, 0.0
    %v325 = vadd.f32 %v323, %v324
    %v326 = vsel %vm301, %v278, 0.0
    %v327 = vadd.f32 %v325, %v326
    %v328 = vsel %vm299, %v282, 0.0
    %v329 = vadd.f32 %v327, %v328
    %v330 = vsel %vm301, %v281, 0.0
    %v331 = vadd.f32 %v329, %v330
    %v332 = vrot.slane %v331, 4
    %v333 = vadd.f32 %v331, %v332
    %v334 = vrot.slane %v333, 2
    %v335 = vadd.f32 %v333, %v334
    %v336 = vrot.slane %v335, 1
    %v337 = vadd.f32 %v335, %v336
    %v338 = vadd.f32 %v241, %v337
    %vm339 = vcmask 122880
    %340 = vst.msk [vmem:[#allocation7] sm:$0x1] %vm339, %v338
    // Predicated region
    $region22: #{tpu_custom_call.1} parent=1 // pred_check
      _
    $region23: #{tpu_custom_call.1} parent=1 // pred_check_branch
      %342 = sbr.rel (0) target = $region25
    $region24: #{tpu_custom_call.1} parent=1 // pred_region
      %s344 = ssub.s32 16, 16
      %345 = vsyncadd [#allocation4], %s344
      %s347 = sshll.u32 [#allocation7], 4
      %s348 = int_to_ptr.vmem [resolvable:$true] %s347
      %350 = dma.vmem_to_hbm [thread:$0]  %s348, 16, %s2, [#allocation4]
    $region25: #{tpu_custom_call.1} parent=1 // pred_fallthru
      _
    // Predicated region
    $region26: #{tpu_custom_call.1} parent=1 // pred_check
      _
    $region27: #{tpu_custom_call.1} parent=1 // pred_check_branch
      %352 = sbr.rel (0) target = $region29
    $region28: #{tpu_custom_call.1} parent=1 // pred_region
      %353 = dma.done [#allocation4], 16
    $region29: #{tpu_custom_call.1} parent=1 // pred_fallthru
      _
    %354 = vsyncpa [#allocation3], 1
    %355 = vsyncpa [#allocation6], 1
    %356 = vsyncpa [#allocation4], 1

</llo_original>
